<compile_context>
chip_gen: v7x
topology: tpu7x:2x2x1
jax: 0.10.0
libtpu: 0.0.40
codegen_flags: <defaults>
</compile_context>

<pallas_src>
import functools

import jax
import jax.numpy as jnp
from jax import lax
from jax.experimental import pallas as pl
from jax.experimental.pallas import tpu as pltpu


def _round_up(v, m):
    return (v + m - 1) // m * m


def _vmem_capacity():
    try:
        return int(pltpu.get_tpu_info().vmem_capacity_bytes)
    except Exception:
        return 64 << 20  # conservative fallback (v7x per-TensorCore VMEM)


def _vmem_limit(block_bytes):
    cap = _vmem_capacity()
    ceiling = cap * 3 // 4               # ~48 MiB on v7x, ~96 MiB on v5e/v6e
    need = 3 * block_bytes + (4 << 20)   # multi-buffering + Mosaic-internal scratch headroom
    return int(min(ceiling, max(16 << 20, need)))


# --------------------------------------------------------------------------
# K-tiled GCNConv + ReLU layer:
#   agg[i-tile] = sum_k A_hat[i-tile, k-tile] @ x[k-tile]   (f32 VMEM accumulator)
#   out[i-tile] = relu(agg @ W + b)                          (on last k)
# --------------------------------------------------------------------------
def _gcn_layer_kernel(adj_ref, x_ref, w_ref, b_ref, out_ref, agg_ref):
    k = pl.program_id(1)

    @pl.when(k == 0)
    def _():
        agg_ref[...] = jnp.zeros_like(agg_ref)

    agg_ref[...] += jnp.dot(adj_ref[...], x_ref[...],
                            preferred_element_type=jnp.float32)

    @pl.when(k == pl.num_programs(1) - 1)
    def _():
        z = jnp.dot(agg_ref[...].astype(jnp.bfloat16), w_ref[...],
                    preferred_element_type=jnp.float32) + b_ref[...]
        out_ref[...] = jnp.maximum(z, 0.0).astype(out_ref.dtype)


def _gcn_layer(a_hat, x, w, b, *, tile):
    n_pad = a_hat.shape[0]
    f_dim = x.shape[1]
    h_dim = w.shape[1]
    blk_bytes = (tile * tile * 2        # A_hat tile (bf16)
                 + tile * f_dim * 2     # x K-tile (bf16)
                 + f_dim * h_dim * 2    # W (resident, bf16)
                 + h_dim * 4            # bias
                 + tile * h_dim * 2     # output tile
                 + tile * f_dim * 4)    # f32 accumulator scratch
    cost = pl.CostEstimate(
        flops=2 * n_pad * n_pad * f_dim + 2 * n_pad * f_dim * h_dim,
        transcendentals=0,
        bytes_accessed=(a_hat.size * 2 + x.size * 2 + w.size * 2
                        + b.size * 4 + n_pad * h_dim * 2))
    return pl.pallas_call(
        _gcn_layer_kernel,
        out_shape=jax.ShapeDtypeStruct((n_pad, h_dim), jnp.bfloat16),
        grid_spec=pltpu.PrefetchScalarGridSpec(
            num_scalar_prefetch=0,
            grid=(n_pad // tile, n_pad // tile),           # (row tiles, K tiles)
            in_specs=[
                pl.BlockSpec((tile, tile), lambda i, k: (i, k)),    # A_hat (i, k) tile
                pl.BlockSpec((tile, f_dim), lambda i, k: (k, 0)),   # x K-tile
                pl.BlockSpec((f_dim, h_dim), lambda i, k: (0, 0)),  # W (resident)
                pl.BlockSpec((1, h_dim), lambda i, k: (0, 0)),      # bias (resident)
            ],
            out_specs=pl.BlockSpec((tile, h_dim), lambda i, k: (i, 0)),
            scratch_shapes=[pltpu.VMEM((tile, f_dim), jnp.float32)]),
        compiler_params=pltpu.CompilerParams(
            dimension_semantics=("parallel", "arbitrary"),
            vmem_limit_bytes=_vmem_limit(blk_bytes)),
        cost_estimate=cost,
    )(a_hat, x, w, b)


# --------------------------------------------------------------------------
# Fused global_add_pool (reduction over node tiles) + dropout(eval) + Linear head.
# Pool operator is (B, N_pad) so each step is a natural (B, tile) @ (tile, H) matmul.
# --------------------------------------------------------------------------
def _pool_head_kernel(pool_ref, x_ref, wlin_ref, blin_ref, out_ref, acc_ref):
    i = pl.program_id(0)

    @pl.when(i == 0)
    def _():
        acc_ref[...] = jnp.zeros_like(acc_ref)

    acc_ref[...] += jnp.dot(pool_ref[...], x_ref[...],
                            preferred_element_type=jnp.float32)

    @pl.when(i == pl.num_programs(0) - 1)
    def _():
        # TODO(synk): F.dropout(p=0.5) is identity in eval mode; training-mode dropout
        # (random mask + 1/(1-p) scaling) is intentionally not implemented here.
        out_ref[...] = jnp.dot(acc_ref[...].astype(jnp.bfloat16), wlin_ref[...],
                               preferred_element_type=jnp.float32) + blin_ref[...]


def _pool_head(pool, x, wlin, blin, *, tile):
    n_graphs, n_pad = pool.shape
    h_dim = x.shape[1]
    p_dim = wlin.shape[1]
    blk_bytes = (n_graphs * tile * 2 + tile * h_dim * 2 + h_dim * p_dim * 2
                 + p_dim * 4 + n_graphs * p_dim * 4 + n_graphs * h_dim * 4)
    cost = pl.CostEstimate(
        flops=2 * n_pad * n_graphs * h_dim + 2 * n_graphs * h_dim * p_dim,
        transcendentals=0,
        bytes_accessed=(pool.size * 2 + x.size * 2 + wlin.size * 2
                        + blin.size * 4 + n_graphs * p_dim * 4))
    return pl.pallas_call(
        _pool_head_kernel,
        out_shape=jax.ShapeDtypeStruct((n_graphs, p_dim), jnp.float32),
        grid_spec=pltpu.PrefetchScalarGridSpec(
            num_scalar_prefetch=0,
            grid=(n_pad // tile,),
            in_specs=[
                pl.BlockSpec((n_graphs, tile), lambda i: (0, i)),   # pool node-tile
                pl.BlockSpec((tile, h_dim), lambda i: (i, 0)),      # node-feature tile
                pl.BlockSpec((h_dim, p_dim), lambda i: (0, 0)),     # head W (resident)
                pl.BlockSpec((1, p_dim), lambda i: (0, 0)),         # head b (resident)
            ],
            out_specs=pl.BlockSpec((n_graphs, p_dim), lambda i: (0, 0)),
            scratch_shapes=[pltpu.VMEM((n_graphs, h_dim), jnp.float32)]),
        compiler_params=pltpu.CompilerParams(
            dimension_semantics=("arbitrary",),
            vmem_limit_bytes=_vmem_limit(blk_bytes)),
        cost_estimate=cost,
    )(pool, x, wlin, blin)


# --------------------------------------------------------------------------
# Fully-fused path for small graphs: all GCN layers + pool + head in ONE pallas_call.
# Everything stays resident in VMEM; no inter-layer HBM round trips, one launch.
# --------------------------------------------------------------------------
def _fused_kernel(num_layers, a_ref, h_ref, ws_ref, bs_ref, pool_ref,
                  wlin_ref, blin_ref, out_ref):
    a = a_ref[...]
    h = h_ref[...]
    for l in range(num_layers):                      # static unroll over layers
        agg = jnp.dot(a, h, preferred_element_type=jnp.float32)
        z = jnp.dot(agg.astype(jnp.bfloat16), ws_ref[l],
                    preferred_element_type=jnp.float32) + bs_ref[l]
        h = jnp.maximum(z, 0.0).astype(jnp.bfloat16)
    pooled = jnp.dot(pool_ref[...], h, preferred_element_type=jnp.float32)
    # dropout(p=0.5) is identity in eval mode.
    out_ref[...] = jnp.dot(pooled.astype(jnp.bfloat16), wlin_ref[...],
                           preferred_element_type=jnp.float32) + blin_ref[...]


def _fused_forward(a_hat, h0, ws, bs, pool, wlin, blin):
    n_pad, w_dim = h0.shape
    num_layers = len(ws)
    n_graphs = pool.shape[0]
    p_dim = wlin.shape[1]
    ws_stack = jnp.stack(ws)          # (L, W, W) bf16
    bs_stack = jnp.stack(bs)          # (L, 1, W) f32
    need = (a_hat.size * 2 + h0.size * 2 + ws_stack.size * 2 + bs_stack.size * 4
            + pool.size * 2 + wlin.size * 2 + blin.size * 4
            + n_graphs * p_dim * 4 + 3 * n_pad * w_dim * 4)
    cost = pl.CostEstimate(
        flops=num_layers * (2 * n_pad * n_pad * w_dim + 2 * n_pad * w_dim * w_dim)
              + 2 * n_graphs * n_pad * w_dim + 2 * n_graphs * w_dim * p_dim,
        transcendentals=0,
        bytes_accessed=need)
    return pl.pallas_call(
        functools.partial(_fused_kernel, num_layers),
        out_shape=jax.ShapeDtypeStruct((n_graphs, p_dim), jnp.float32),
        in_specs=[pl.BlockSpec(memory_space=pltpu.MemorySpace.VMEM)] * 7,
        out_specs=pl.BlockSpec(memory_space=pltpu.MemorySpace.VMEM),
        compiler_params=pltpu.CompilerParams(vmem_limit_bytes=_vmem_limit(need)),
        cost_estimate=cost,
    )(a_hat, h0, ws_stack, bs_stack, pool, wlin, blin)


# --------------------------------------------------------------------------
# Full forward (matches GCNlayerssum.forward in eval mode).
# --------------------------------------------------------------------------
@functools.partial(jax.jit, static_argnames=("num_graphs", "tile", "path"))
def gcn_layers_sum_forward(x, edge_index, batch, params, num_graphs,
                           tile=256, path="auto"):
    ws, bs, wlin, blin = params
    n, n_f = x.shape
    n_pred = wlin.shape[1]
    num_layers = len(ws)

    # Lane-dense padded widths (128-lane multiples) for features / hidden / predictions.
    w_dim = _round_up(max(n_f, wlin.shape[0], max(w.shape[1] for w in ws)), 128)
    p_dim = _round_up(n_pred, 128)

    # Row/K tile: multiple of 128, never larger than the (128-rounded) graph.
    tile_eff = min(_round_up(tile, 128), _round_up(n, 128))
    n_pad = _round_up(n, tile_eff)

    src, dst = edge_index[0], edge_index[1]

    # Dense symmetric-normalized adjacency with self loops (PyG gcn_norm), built directly
    # in bf16 (no O(N^2) f32 intermediate). Padded nodes only carry a self loop and are
    # excluded from pooling, so they never affect the result.
    deg = jnp.zeros((n_pad,), jnp.float32).at[dst].add(1.0) + 1.0   # in-degree + self loop
    dinv = lax.rsqrt(deg)
    edge_w = (dinv[dst] * dinv[src]).astype(jnp.bfloat16)
    ar = jnp.arange(n_pad)
    a_hat = (jnp.zeros((n_pad, n_pad), jnp.bfloat16)
             .at[dst, src].add(edge_w)
             .at[ar, ar].add((dinv * dinv).astype(jnp.bfloat16)))
    # TODO(synk): int8 (v5e/v6e) / fp8 (v7x) A_hat would halve the dominant HBM stream;
    # kept bf16 here so the compounding D^-1/2 weights stay accurate across layers.

    # global_add_pool operator as (B, N_pad) one-hot membership (exact in bf16).
    pool = (jnp.zeros((num_graphs, n_pad), jnp.float32)
            .at[batch, jnp.arange(n)].set(1.0).astype(jnp.bfloat16))

    # Node features and parameters, zero-padded to lane-dense widths.
    h = jnp.zeros((n_pad, w_dim), jnp.float32).at[:n, :n_f].set(x).astype(jnp.bfloat16)
    ws_p, bs_p = [], []
    for w, b in zip(ws, bs):
        wp = jnp.zeros((w_dim, w_dim), jnp.float32).at[:w.shape[0], :w.shape[1]].set(w)
        bp = jnp.zeros((1, w_dim), jnp.float32).at[:, :b.shape[1]].set(b)
        ws_p.append(wp.astype(jnp.bfloat16))
        bs_p.append(bp)
    wlin_p = (jnp.zeros((w_dim, p_dim), jnp.float32)
              .at[:wlin.shape[0], :n_pred].set(wlin).astype(jnp.bfloat16))
    blin_p = jnp.zeros((1, p_dim), jnp.float32).at[:, :n_pred].set(blin)

    # Choose single fused kernel (small graphs) vs tiled per-layer kernels (large graphs).
    fused_bytes = (n_pad * n_pad * 2 + n_pad * w_dim * 10
                   + num_layers * (w_dim * w_dim * 2 + w_dim * 4)
                   + num_graphs * n_pad * 2 + w_dim * p_dim * 2 + p_dim * 4)
    use_fused = (path == "fused") or (
        path == "auto" and fused_bytes <= min(_vmem_capacity() // 2, 32 << 20))

    if use_fused:
        out = _fused_forward(a_hat, h, ws_p, bs_p, pool, wlin_p, blin_p)
    else:
        # num_layers x (GCNConv + ReLU). NOTE: the PyTorch forward only calls
        # convs[0 : num_layers]; convs[num_layers] / convs[num_layers+1] are never used.
        for wp, bp in zip(ws_p, bs_p):
            h = _gcn_layer(a_hat, h, wp, bp, tile=tile_eff)
        out = _pool_head(pool, h, wlin_p, blin_p, tile=tile_eff)

    return out[:, :n_pred]


# --------------------------------------------------------------------------
# Deterministic parameter init.
# --------------------------------------------------------------------------
def init_params(key, n_f, hidden_channels, n_hlin, n_pred, n_layers):
    # The PyTorch forward applies self.lin (n_hlin -> n_pred) to the pooled
    # hidden_channels-dim features, which only type-checks when hidden_channels == n_hlin.
    assert hidden_channels == n_hlin
    keys = jax.random.split(key, 2 * n_layers + 2)
    dims = [n_f] + [hidden_channels] * n_layers
    ws, bs = [], []
    for l in range(n_layers):
        ws.append(0.2 * jax.random.normal(keys[2 * l], (dims[l], dims[l + 1]), jnp.float32))
        bs.append(0.05 * jax.random.normal(keys[2 * l + 1], (1, dims[l + 1]), jnp.float32))
    wlin = 0.2 * jax.random.normal(keys[-2], (n_hlin, n_pred), jnp.float32)
    blin = 0.05 * jax.random.normal(keys[-1], (1, n_pred), jnp.float32)
    return tuple(ws), tuple(bs), wlin, blin


# --------------------------------------------------------------------------
# Pure-JAX f32 reference (scatter/gather formulation of GCNConv).
# --------------------------------------------------------------------------
def reference_forward(x, edge_index, batch, params, num_graphs):
    ws, bs, wlin, blin = params
    src, dst = edge_index[0], edge_index[1]
    n = x.shape[0]
    deg = jnp.zeros((n,), jnp.float32).at[dst].add(1.0) + 1.0   # in-degree + self loop
    dinv = 1.0 / jnp.sqrt(deg)
    norm = dinv[dst] * dinv[src]                                # per-edge weight
    h = x
    for w, b in zip(ws, bs):
        agg = jnp.zeros((n, h.shape[1]), jnp.float32).at[dst].add(norm[:, None] * h[src])
        agg = agg + (dinv ** 2)[:, None] * h                    # self-loop term
        h = jax.nn.relu(agg @ w + b)
    pooled = jnp.zeros((num_graphs, h.shape[1]), jnp.float32).at[batch].add(h)
    return pooled @ wlin + blin                                 # dropout = identity (eval)


if __name__ == "__main__":
    # Module hyper-params: n_f=5, hidden_channels=32, n_hlin=32, n_pred=3, n_layers=3.
    n_f, hidden_channels, n_hlin, n_pred, n_layers = 5, 32, 32, 3, 3
    num_graphs, nodes_per = 2, 16
    n_nodes = num_graphs * nodes_per

    # Deterministic bidirectional ring graph per molecule.
    rows, cols = [], []
    for g in range(num_graphs):
        for i in range(nodes_per):
            a = g * nodes_per + i
            b = g * nodes_per + (i + 1) % nodes_per
            rows += [a, b]
            cols += [b, a]
    edge_index = jnp.array([rows, cols], dtype=jnp.int32)        # [src, dst]
    batch = jnp.array(sum([[g] * nodes_per for g in range(num_graphs)], []),
                      dtype=jnp.int32)

    key = jax.random.PRNGKey(0)
    kx, kp = jax.random.split(key)
    x = jax.random.normal(kx, (n_nodes, n_f), jnp.float32)
    params = init_params(kp, n_f, hidden_channels, n_hlin, n_pred, n_layers)

    ref = reference_forward(x, edge_index, batch, params, num_graphs)

    # Exercise BOTH code paths: the fully-fused small-graph kernel and the tiled kernels.
    out_fused = jax.block_until_ready(
        gcn_layers_sum_forward(x, edge_index, batch, params,
                               num_graphs=num_graphs, path="fused"))
    out_tiled = jax.block_until_ready(
        gcn_layers_sum_forward(x, edge_index, batch, params,
                               num_graphs=num_graphs, path="tiled"))

    if not jnp.allclose(out_fused, ref, atol=5e-2, rtol=5e-2):
        raise AssertionError("Fused Pallas kernel does not match JAX reference")
    if not jnp.allclose(out_tiled, ref, atol=5e-2, rtol=5e-2):
        raise AssertionError("Tiled Pallas kernels do not match JAX reference")

    print("KERNEL_OK")
</pallas_src>

<mosaic_0001>
module attributes {stable_mosaic.version = 11 : i64} {
  func.func private @main(%arg0: i32) attributes {dimension_semantics = [#tpu.dimension_semantics<core_parallel>], iteration_bounds = array<i64: 2>, tpu.core_type = #tpu.core_type<sc_scalar_subcore>, window_params = []} {
    return
  }
}

module attributes {stable_mosaic.version = 11 : i64} {
  func.func private @main(%arg0: i32) attributes {dimension_semantics = [#tpu.dimension_semantics<core_parallel>], iteration_bounds = array<i64: 2>, tpu.core_type = #tpu.core_type<sc_scalar_subcore>, window_params = []} {
    return
  }
}

module attributes {stable_mosaic.version = 11 : i64} {
  func.func @_fused_kernel(%arg0: memref<128x128xbf16, #tpu.memory_space<vmem>>, %arg1: memref<128x128xbf16, #tpu.memory_space<vmem>>, %arg2: memref<3x128x128xbf16, #tpu.memory_space<vmem>>, %arg3: memref<3x1x128xf32, #tpu.memory_space<vmem>>, %arg4: memref<2x128xbf16, #tpu.memory_space<vmem>>, %arg5: memref<128x128xbf16, #tpu.memory_space<vmem>>, %arg6: memref<1x128xf32, #tpu.memory_space<vmem>>, %arg7: memref<2x128xf32, #tpu.memory_space<vmem>>) attributes {dimension_semantics = [], scalar_prefetch = 0 : i64, scratch_operands = 0 : i64, tpu.core_type = #tpu.core_type<tc>} {
    %c0 = arith.constant 0 : index
    %c0_0 = arith.constant 0 : index
    %0 = vector.load %arg0[%c0, %c0_0] : memref<128x128xbf16, #tpu.memory_space<vmem>>, vector<128x128xbf16>
    %c0_1 = arith.constant 0 : index
    %c0_2 = arith.constant 0 : index
    %1 = vector.load %arg1[%c0_1, %c0_2] : memref<128x128xbf16, #tpu.memory_space<vmem>>, vector<128x128xbf16>
    %cst = arith.constant dense<0.000000e+00> : vector<128x128xf32>
    %2 = tpu.matmul %0, %1, %cst {dimension_numbers = #tpu.dot_dimension_numbers<[1], [0], [0], [1], [0, 0, 1, 1], [], []>} : vector<128x128xbf16>, vector<128x128xbf16>, vector<128x128xf32> -> vector<128x128xf32>
    %3 = arith.truncf %2 : vector<128x128xf32> to vector<128x128xbf16>
    %c0_3 = arith.constant 0 : index
    %c0_4 = arith.constant 0 : index
    %c0_5 = arith.constant 0 : index
    %4 = vector.load %arg2[%c0_3, %c0_4, %c0_5] : memref<3x128x128xbf16, #tpu.memory_space<vmem>>, vector<1x128x128xbf16>
    %5 = vector.shape_cast %4 : vector<1x128x128xbf16> to vector<128x128xbf16>
    %cst_6 = arith.constant dense<0.000000e+00> : vector<128x128xf32>
    %6 = tpu.matmul %3, %5, %cst_6 {dimension_numbers = #tpu.dot_dimension_numbers<[1], [0], [0], [1], [0, 0, 1, 1], [], []>} : vector<128x128xbf16>, vector<128x128xbf16>, vector<128x128xf32> -> vector<128x128xf32>
    %c0_7 = arith.constant 0 : index
    %c0_8 = arith.constant 0 : index
    %c0_9 = arith.constant 0 : index
    %7 = vector.load %arg3[%c0_7, %c0_8, %c0_9] : memref<3x1x128xf32, #tpu.memory_space<vmem>>, vector<1x1x128xf32>
    %8 = vector.shape_cast %7 : vector<1x1x128xf32> to vector<1x128xf32>
    %9 = vector.broadcast %8 : vector<1x128xf32> to vector<128x128xf32>
    %10 = arith.addf %6, %9 : vector<128x128xf32>
    %cst_10 = arith.constant 0.000000e+00 : f32
    %11 = vector.broadcast %cst_10 : f32 to vector<128x128xf32>
    %12 = arith.maximumf %10, %11 : vector<128x128xf32>
    %13 = arith.truncf %12 : vector<128x128xf32> to vector<128x128xbf16>
    %cst_11 = arith.constant dense<0.000000e+00> : vector<128x128xf32>
    %14 = tpu.matmul %0, %13, %cst_11 {dimension_numbers = #tpu.dot_dimension_numbers<[1], [0], [0], [1], [0, 0, 1, 1], [], []>} : vector<128x128xbf16>, vector<128x128xbf16>, vector<128x128xf32> -> vector<128x128xf32>
    %15 = arith.truncf %14 : vector<128x128xf32> to vector<128x128xbf16>
    %c1 = arith.constant 1 : index
    %c0_12 = arith.constant 0 : index
    %c0_13 = arith.constant 0 : index
    %16 = vector.load %arg2[%c1, %c0_12, %c0_13] : memref<3x128x128xbf16, #tpu.memory_space<vmem>>, vector<1x128x128xbf16>
    %17 = vector.shape_cast %16 : vector<1x128x128xbf16> to vector<128x128xbf16>
    %cst_14 = arith.constant dense<0.000000e+00> : vector<128x128xf32>
    %18 = tpu.matmul %15, %17, %cst_14 {dimension_numbers = #tpu.dot_dimension_numbers<[1], [0], [0], [1], [0, 0, 1, 1], [], []>} : vector<128x128xbf16>, vector<128x128xbf16>, vector<128x128xf32> -> vector<128x128xf32>
    %c1_15 = arith.constant 1 : index
    %c0_16 = arith.constant 0 : index
    %c0_17 = arith.constant 0 : index
    %19 = vector.load %arg3[%c1_15, %c0_16, %c0_17] : memref<3x1x128xf32, #tpu.memory_space<vmem>>, vector<1x1x128xf32>
    %20 = vector.shape_cast %19 : vector<1x1x128xf32> to vector<1x128xf32>
    %21 = vector.broadcast %20 : vector<1x128xf32> to vector<128x128xf32>
    %22 = arith.addf %18, %21 : vector<128x128xf32>
    %cst_18 = arith.constant 0.000000e+00 : f32
    %23 = vector.broadcast %cst_18 : f32 to vector<128x128xf32>
    %24 = arith.maximumf %22, %23 : vector<128x128xf32>
    %25 = arith.truncf %24 : vector<128x128xf32> to vector<128x128xbf16>
    %cst_19 = arith.constant dense<0.000000e+00> : vector<128x128xf32>
    %26 = tpu.matmul %0, %25, %cst_19 {dimension_numbers = #tpu.dot_dimension_numbers<[1], [0], [0], [1], [0, 0, 1, 1], [], []>} : vector<128x128xbf16>, vector<128x128xbf16>, vector<128x128xf32> -> vector<128x128xf32>
    %27 = arith.truncf %26 : vector<128x128xf32> to vector<128x128xbf16>
    %c2 = arith.constant 2 : index
    %c0_20 = arith.constant 0 : index
    %c0_21 = arith.constant 0 : index
    %28 = vector.load %arg2[%c2, %c0_20, %c0_21] : memref<3x128x128xbf16, #tpu.memory_space<vmem>>, vector<1x128x128xbf16>
    %29 = vector.shape_cast %28 : vector<1x128x128xbf16> to vector<128x128xbf16>
    %cst_22 = arith.constant dense<0.000000e+00> : vector<128x128xf32>
    %30 = tpu.matmul %27, %29, %cst_22 {dimension_numbers = #tpu.dot_dimension_numbers<[1], [0], [0], [1], [0, 0, 1, 1], [], []>} : vector<128x128xbf16>, vector<128x128xbf16>, vector<128x128xf32> -> vector<128x128xf32>
    %c2_23 = arith.constant 2 : index
    %c0_24 = arith.constant 0 : index
    %c0_25 = arith.constant 0 : index
    %31 = vector.load %arg3[%c2_23, %c0_24, %c0_25] : memref<3x1x128xf32, #tpu.memory_space<vmem>>, vector<1x1x128xf32>
    %32 = vector.shape_cast %31 : vector<1x1x128xf32> to vector<1x128xf32>
    %33 = vector.broadcast %32 : vector<1x128xf32> to vector<128x128xf32>
    %34 = arith.addf %30, %33 : vector<128x128xf32>
    %cst_26 = arith.constant 0.000000e+00 : f32
    %35 = vector.broadcast %cst_26 : f32 to vector<128x128xf32>
    %36 = arith.maximumf %34, %35 : vector<128x128xf32>
    %37 = arith.truncf %36 : vector<128x128xf32> to vector<128x128xbf16>
    %c0_27 = arith.constant 0 : index
    %c0_28 = arith.constant 0 : index
    %38 = vector.load %arg4[%c0_27, %c0_28] : memref<2x128xbf16, #tpu.memory_space<vmem>>, vector<2x128xbf16>
    %cst_29 = arith.constant dense<0.000000e+00> : vector<2x128xf32>
    %39 = tpu.matmul %38, %37, %cst_29 {dimension_numbers = #tpu.dot_dimension_numbers<[1], [0], [0], [1], [0, 0, 1, 1], [], []>} : vector<2x128xbf16>, vector<128x128xbf16>, vector<2x128xf32> -> vector<2x128xf32>
    %40 = arith.truncf %39 : vector<2x128xf32> to vector<2x128xbf16>
    %c0_30 = arith.constant 0 : index
    %c0_31 = arith.constant 0 : index
    %41 = vector.load %arg5[%c0_30, %c0_31] : memref<128x128xbf16, #tpu.memory_space<vmem>>, vector<128x128xbf16>
    %cst_32 = arith.constant dense<0.000000e+00> : vector<2x128xf32>
    %42 = tpu.matmul %40, %41, %cst_32 {dimension_numbers = #tpu.dot_dimension_numbers<[1], [0], [0], [1], [0, 0, 1, 1], [], []>} : vector<2x128xbf16>, vector<128x128xbf16>, vector<2x128xf32> -> vector<2x128xf32>
    %c0_33 = arith.constant 0 : index
    %c0_34 = arith.constant 0 : index
    %43 = vector.load %arg6[%c0_33, %c0_34] : memref<1x128xf32, #tpu.memory_space<vmem>>, vector<1x128xf32>
    %44 = vector.broadcast %43 : vector<1x128xf32> to vector<2x128xf32>
    %45 = arith.addf %42, %44 : vector<2x128xf32>
    %c0_35 = arith.constant 0 : index
    %c0_36 = arith.constant 0 : index
    %46 = vector.load %arg7[%c0_35, %c0_36] : memref<2x128xf32, #tpu.memory_space<vmem>>, vector<2x128xf32>
    tpu.vector_store %arg7[%c0_35, %c0_36], %45 {strides = array<i32>} : memref<2x128xf32, #tpu.memory_space<vmem>>, vector<2x128xf32>,
    return
  }
}

</mosaic_0001>

<llo_original>
// kernel: gcn_layers_sum_forward.1
$region0: #{gcn_layers_sum_forward.1}
  #allocation0 [shape = 'u32[]', space=smem, size = 0x4, offset = 0x4, fixed_abs, tag = 'smem constant byte address 0x4 - core index']
  #allocation1 [shape = 'u32[144,128]{1,0:T(1,128)}', space=vmem, size = 0x12000, scoped, tag = 'internal scratch']
  %s0 = inlined_call_operand.vmem [shape: bf16[128,128], index: 0, kind: input, shape index: {}]
  %s1 = inlined_call_operand.vmem [shape: bf16[128,128], index: 1, kind: input, shape index: {}]
  %s2 = inlined_call_operand.vmem [shape: bf16[3,128,128], index: 2, kind: input, shape index: {}]
  %s3 = inlined_call_operand.vmem [shape: f32[3,1,128], index: 3, kind: input, shape index: {}]
  %s4 = inlined_call_operand.vmem [shape: bf16[2,128], index: 4, kind: input, shape index: {}]
  %s5 = inlined_call_operand.vmem [shape: bf16[128,128], index: 5, kind: input, shape index: {}]
  %s6 = inlined_call_operand.vmem [shape: f32[1,128], index: 6, kind: input, shape index: {}]
  %s7 = inlined_call_operand.hbm [shape: f32[2,128], index: 7, kind: output, shape index: {}]
  %s8 = sld [smem:[#allocation0]]
  $region38: #{gcn_layers_sum_forward.1} parent=0
    _
  %s10 = ssub.s32 1, %s8
  %s11 = scalar_select 0, %s10, %s8
  $region1: #{gcn_layers_sum_forward.1} parent=0
    #allocation2 [shape = 'u8[1024]{0}', space=vmem, size = 0x400, scoped, tag = 'output window, operand 0, single buffered']
    #allocation3 [shape = 's32[1]{0}', space=sflag, size = 0x4, scoped, tag = 'scoped memory for gcn_layers_sum_forward.1']
    %12 = vsyncpa [#allocation3], 0
    // Predicated region
    $region2: #{gcn_layers_sum_forward.1} parent=1 // pred_check
      _
    $region3: #{gcn_layers_sum_forward.1} parent=1 // pred_check_branch
      %14 = sbr.rel (0) target = $region5
    $region4: #{gcn_layers_sum_forward.1} parent=1 // pred_region
      _
    $region5: #{gcn_layers_sum_forward.1} parent=1 // pred_fallthru
      _
    // Predicated region
    $region6: #{gcn_layers_sum_forward.1} parent=1 // pred_check
      _
    $region7: #{gcn_layers_sum_forward.1} parent=1 // pred_check_branch
      %16 = sbr.rel (0) target = $region9
    $region8: #{gcn_layers_sum_forward.1} parent=1 // pred_region
      _
    $region9: #{gcn_layers_sum_forward.1} parent=1 // pred_fallthru
      _
    // Predicated region
    $region10: #{gcn_layers_sum_forward.1} parent=1 // pred_check
      _
    $region11: #{gcn_layers_sum_forward.1} parent=1 // pred_check_branch
      %18 = sbr.rel (0) target = $region13
    $region12: #{gcn_layers_sum_forward.1} parent=1 // pred_region
      _
    $region13: #{gcn_layers_sum_forward.1} parent=1 // pred_fallthru
      _
    // Predicated region
    $region14: #{gcn_layers_sum_forward.1} parent=1 // pred_check
      _
    $region15: #{gcn_layers_sum_forward.1} parent=1 // pred_check_branch
      %20 = sbr.rel (0) target = $region17
    $region16: #{gcn_layers_sum_forward.1} parent=1 // pred_region
      _
    $region17: #{gcn_layers_sum_forward.1} parent=1 // pred_fallthru
      _
    // Predicated region
    $region18: #{gcn_layers_sum_forward.1} parent=1 // pred_check
      _
    $region19: #{gcn_layers_sum_forward.1} parent=1 // pred_check_branch
      %22 = sbr.rel (0) target = $region21
    $region20: #{gcn_layers_sum_forward.1} parent=1 // pred_region
      _
    $region21: #{gcn_layers_sum_forward.1} parent=1 // pred_fallthru
      _
    // Predicated region
    $region22: #{gcn_layers_sum_forward.1} parent=1 // pred_check
      _
    $region23: #{gcn_layers_sum_forward.1} parent=1 // pred_check_branch
      %24 = sbr.rel (0) target = $region25
    $region24: #{gcn_layers_sum_forward.1} parent=1 // pred_region
      _
    $region25: #{gcn_layers_sum_forward.1} parent=1 // pred_fallthru
      _
    // Predicated region
    $region26: #{gcn_layers_sum_forward.1} parent=1 // pred_check
      _
    $region27: #{gcn_layers_sum_forward.1} parent=1 // pred_check_branch
      %26 = sbr.rel (0) target = $region29
    $region28: #{gcn_layers_sum_forward.1} parent=1 // pred_region
      _
    $region29: #{gcn_layers_sum_forward.1} parent=1 // pred_fallthru
      _
    %v28 = vld [vmem:[%s0] sm:$0xf]
    %v29 = vld [vmem:[%s0 + $0x4] sm:$0xf]
    %v30 = vld [vmem:[%s0 + $0x8] sm:$0xf]
    %v31 = vld [vmem:[%s0 + $0xc] sm:$0xf]
    %v32 = vld [vmem:[%s0 + $0x10] sm:$0xf]
    %v33 = vld [vmem:[%s0 + $0x14] sm:$0xf]
    %v34 = vld [vmem:[%s0 + $0x18] sm:$0xf]
    %v35 = vld [vmem:[%s0 + $0x1c] sm:$0xf]
    %v36 = vld [vmem:[%s0 + $0x20] sm:$0xf]
    %v37 = vld [vmem:[%s0 + $0x24] sm:$0xf]
    %v38 = vld [vmem:[%s0 + $0x28] sm:$0xf]
    %v39 = vld [vmem:[%s0 + $0x2c] sm:$0xf]
    %v40 = vld [vmem:[%s0 + $0x30] sm:$0xf]
    %v41 = vld [vmem:[%s0 + $0x34] sm:$0xf]
    %v42 = vld [vmem:[%s0 + $0x38] sm:$0xf]
    %v43 = vld [vmem:[%s0 + $0x3c] sm:$0xf]
    %v44 = vld [vmem:[%s1] sm:$0xf]
    %v45 = vld [vmem:[%s1 + $0x4] sm:$0xf]
    %v46 = vld [vmem:[%s1 + $0x8] sm:$0xf]
    %v47 = vld [vmem:[%s1 + $0xc] sm:$0xf]
    %v48 = vld [vmem:[%s1 + $0x10] sm:$0xf]
    %v49 = vld [vmem:[%s1 + $0x14] sm:$0xf]
    %v50 = vld [vmem:[%s1 + $0x18] sm:$0xf]
    %v51 = vld [vmem:[%s1 + $0x1c] sm:$0xf]
    %v52 = vld [vmem:[%s1 + $0x20] sm:$0xf]
    %v53 = vld [vmem:[%s1 + $0x24] sm:$0xf]
    %v54 = vld [vmem:[%s1 + $0x28] sm:$0xf]
    %v55 = vld [vmem:[%s1 + $0x2c] sm:$0xf]
    %v56 = vld [vmem:[%s1 + $0x30] sm:$0xf]
    %v57 = vld [vmem:[%s1 + $0x34] sm:$0xf]
    %v58 = vld [vmem:[%s1 + $0x38] sm:$0xf]
    %v59 = vld [vmem:[%s1 + $0x3c] sm:$0xf]
    %v76 = vunpack.c.l.b16 %v28
    %v77 = vunpack.c.l.b16 %v29
    %v78 = vunpack.c.l.b16 %v30
    %v79 = vunpack.c.l.b16 %v31
    %v80 = vunpack.c.l.b16 %v32
    %v81 = vunpack.c.l.b16 %v33
    %v82 = vunpack.c.l.b16 %v34
    %v83 = vunpack.c.l.b16 %v35
    %v84 = vunpack.c.l.b16 %v36
    %v85 = vunpack.c.l.b16 %v37
    %v86 = vunpack.c.l.b16 %v38
    %v87 = vunpack.c.l.b16 %v39
    %v88 = vunpack.c.l.b16 %v40
    %v89 = vunpack.c.l.b16 %v41
    %v90 = vunpack.c.l.b16 %v42
    %v91 = vunpack.c.l.b16 %v43
    %v92 = vpack.c.b16 %v77, %v76
    %v93 = vpack.c.b16 %v79, %v78
    %v94 = vpack.c.b16 %v81, %v80
    %v95 = vpack.c.b16 %v83, %v82
    %v96 = vpack.c.b16 %v85, %v84
    %v97 = vpack.c.b16 %v87, %v86
    %v98 = vpack.c.b16 %v89, %v88
    %v99 = vpack.c.b16 %v91, %v90
    %v124 = vunpack.c.l.b16 %v44
    %v125 = vunpack.c.l.b16 %v45
    %v126 = vunpack.c.l.b16 %v46
    %v127 = vunpack.c.l.b16 %v47
    %v128 = vunpack.c.l.b16 %v48
    %v129 = vunpack.c.l.b16 %v49
    %v130 = vunpack.c.l.b16 %v50
    %v131 = vunpack.c.l.b16 %v51
    %v132 = vunpack.c.l.b16 %v52
    %v133 = vunpack.c.l.b16 %v53
    %v134 = vunpack.c.l.b16 %v54
    %v135 = vunpack.c.l.b16 %v55
    %v136 = vunpack.c.l.b16 %v56
    %v137 = vunpack.c.l.b16 %v57
    %v138 = vunpack.c.l.b16 %v58
    %v139 = vunpack.c.l.b16 %v59
    %v140 = vpack.c.b16 %v125, %v124
    %v141 = vpack.c.b16 %v127, %v126
    %v142 = vpack.c.b16 %v129, %v128
    %v143 = vpack.c.b16 %v131, %v130
    %v144 = vpack.c.b16 %v133, %v132
    %v145 = vpack.c.b16 %v135, %v134
    %v146 = vpack.c.b16 %v137, %v136
    %v147 = vpack.c.b16 %v139, %v138
    %156 = vmatprep.subr.bf16.mxu0 0
    %157 = vmatpush1.bf16.msra.mxu0 %v140
    %158 = vmatprep.subr.bf16.mxu0 0
    %159 = vmatpush1.bf16.msra.mxu0 %v141
    %160 = vmatprep.subr.bf16.mxu0 0
    %161 = vmatpush1.bf16.msra.mxu0 %v142
    %162 = vmatprep.subr.bf16.mxu0 0
    %163 = vmatpush1.bf16.msra.mxu0 %v143
    %164 = vmatprep.subr.bf16.mxu0 0
    %165 = vmatpush1.bf16.msra.mxu0 %v144
    %166 = vmatprep.subr.bf16.mxu0 0
    %167 = vmatpush1.bf16.msra.mxu0 %v145
    %168 = vmatprep.subr.bf16.mxu0 0
    %169 = vmatpush1.bf16.msra.mxu0 %v146
    %170 = vmatprep.subr.bf16.mxu0 0
    %171 = vmatpush1.bf16.msra.mxu0 %v147
    %172 = vmatprep.subr.bf16.mxu0 0
    %173 = vmatpush1.bf16.msra.mxu0 0
    %174 = vmatprep.subr.bf16.mxu0 0
    %175 = vmatpush1.bf16.msra.mxu0 0
    %176 = vmatprep.subr.bf16.mxu0 0
    %177 = vmatpush1.bf16.msra.mxu0 0
    %178 = vmatprep.subr.bf16.mxu0 0
    %179 = vmatpush1.bf16.msra.mxu0 0
    %180 = vmatprep.subr.bf16.mxu0 0
    %181 = vmatpush1.bf16.msra.mxu0 0
    %182 = vmatprep.subr.bf16.mxu0 0
    %183 = vmatpush1.bf16.msra.mxu0 0
    %184 = vmatprep.subr.bf16.mxu0 0
    %185 = vmatpush1.bf16.msra.mxu0 0
    %186 = vmatprep.subr.bf16.mxu0 0
    %187 = vmatpush1.bf16.msra.mxu0 0
    %188 = vmatprep.mubr.bf16.mxu0 0
    %189 = vmatmul.mubr.bf16.gmra.mrb[0].mxu0 %v92
    %v190 = vpop.f32.mrb[0].mxu0
    %v191 = vadd.f32 0.0, %v190
    %v192 = vpop.f32.mrb[0].mxu0
    %v193 = vpop.f32.mrb[0].mxu0
    %v194 = vadd.f32 0.0, %v193
    %v195 = vpop.f32.mrb[0].mxu0
    %196 = vmatprep.mubr.bf16.mxu0 0
    %197 = vmatmul.mubr.bf16.gmra.mrb[0].mxu0 %v93
    %v198 = vpop.f32.mrb[0].mxu0
    %v199 = vadd.f32 0.0, %v198
    %v200 = vpop.f32.mrb[0].mxu0
    %v201 = vpop.f32.mrb[0].mxu0
    %v202 = vadd.f32 0.0, %v201
    %v203 = vpop.f32.mrb[0].mxu0
    %204 = vmatprep.mubr.bf16.mxu0 0
    %205 = vmatmul.mubr.bf16.gmra.mrb[0].mxu0 %v94
    %v206 = vpop.f32.mrb[0].mxu0
    %v207 = vadd.f32 0.0, %v206
    %v208 = vpop.f32.mrb[0].mxu0
    %v209 = vpop.f32.mrb[0].mxu0
    %v210 = vadd.f32 0.0, %v209
    %v211 = vpop.f32.mrb[0].mxu0
    %212 = vmatprep.mubr.bf16.mxu0 0
    %213 = vmatmul.mubr.bf16.gmra.mrb[0].mxu0 %v95
    %v214 = vpop.f32.mrb[0].mxu0
    %v215 = vadd.f32 0.0, %v214
    %v216 = vpop.f32.mrb[0].mxu0
    %v217 = vpop.f32.mrb[0].mxu0
    %v218 = vadd.f32 0.0, %v217
    %v219 = vpop.f32.mrb[0].mxu0
    %220 = vmatprep.mubr.bf16.mxu0 0
    %221 = vmatmul.mubr.bf16.gmra.mrb[0].mxu0 %v96
    %v222 = vpop.f32.mrb[0].mxu0
    %v223 = vadd.f32 0.0, %v222
    %v224 = vpop.f32.mrb[0].mxu0
    %v225 = vpop.f32.mrb[0].mxu0
    %v226 = vadd.f32 0.0, %v225
    %v227 = vpop.f32.mrb[0].mxu0
    %228 = vmatprep.mubr.bf16.mxu0 0
    %229 = vmatmul.mubr.bf16.gmra.mrb[0].mxu0 %v97
    %v230 = vpop.f32.mrb[0].mxu0
    %v231 = vadd.f32 0.0, %v230
    %v232 = vpop.f32.mrb[0].mxu0
    %v233 = vpop.f32.mrb[0].mxu0
    %v234 = vadd.f32 0.0, %v233
    %v235 = vpop.f32.mrb[0].mxu0
    %236 = vmatprep.mubr.bf16.mxu0 0
    %237 = vmatmul.mubr.bf16.gmra.mrb[0].mxu0 %v98
    %v238 = vpop.f32.mrb[0].mxu0
    %v239 = vadd.f32 0.0, %v238
    %v240 = vpop.f32.mrb[0].mxu0
    %v241 = vpop.f32.mrb[0].mxu0
    %v242 = vadd.f32 0.0, %v241
    %v243 = vpop.f32.mrb[0].mxu0
    %244 = vmatprep.mubr.bf16.mxu0 0
    %245 = vmatmul.mubr.bf16.gmra.mrb[0].mxu0 %v99
    %v246 = vpop.f32.mrb[0].mxu0
    %v247 = vadd.f32 0.0, %v246
    %v248 = vpop.f32.mrb[0].mxu0
    %v249 = vpop.f32.mrb[0].mxu0
    %v250 = vadd.f32 0.0, %v249
    %v251 = vpop.f32.mrb[0].mxu0
    %252 = vdwg.mxu0
    %v253 = vpack.c.bf16 %v194, %v191
    %v254 = vpack.c.bf16 %v202, %v199
    %v255 = vpack.c.bf16 %v210, %v207
    %v256 = vpack.c.bf16 %v218, %v215
    %v257 = vpack.c.bf16 %v226, %v223
    %v258 = vpack.c.bf16 %v234, %v231
    %v259 = vpack.c.bf16 %v242, %v239
    %v260 = vpack.c.bf16 %v250, %v247
    %v261 = vld [vmem:[%s2] sm:$0xf]
    %v262 = vld [vmem:[%s2 + $0x4] sm:$0xf]
    %v263 = vld [vmem:[%s2 + $0x8] sm:$0xf]
    %v264 = vld [vmem:[%s2 + $0xc] sm:$0xf]
    %v265 = vld [vmem:[%s2 + $0x10] sm:$0xf]
    %v266 = vld [vmem:[%s2 + $0x14] sm:$0xf]
    %v267 = vld [vmem:[%s2 + $0x18] sm:$0xf]
    %v268 = vld [vmem:[%s2 + $0x1c] sm:$0xf]
    %v269 = vld [vmem:[%s2 + $0x20] sm:$0xf]
    %v270 = vld [vmem:[%s2 + $0x24] sm:$0xf]
    %v271 = vld [vmem:[%s2 + $0x28] sm:$0xf]
    %v272 = vld [vmem:[%s2 + $0x2c] sm:$0xf]
    %v273 = vld [vmem:[%s2 + $0x30] sm:$0xf]
    %v274 = vld [vmem:[%s2 + $0x34] sm:$0xf]
    %v275 = vld [vmem:[%s2 + $0x38] sm:$0xf]
    %v276 = vld [vmem:[%s2 + $0x3c] sm:$0xf]
    %v277 = vld [vmem:[%s3] sm:$0x1]
    %v279 = vlaneseq
    %v280 = vshrl.u32 %v279, 7
    %v281 = vsub.s32 0, %v280
    %v282 = vrot.slane %v277, %v281
    %v300 = vunpack.c.l.b16 %v261
    %v301 = vunpack.c.l.b16 %v262
    %v302 = vunpack.c.l.b16 %v263
    %v303 = vunpack.c.l.b16 %v264
    %v304 = vunpack.c.l.b16 %v265
    %v305 = vunpack.c.l.b16 %v266
    %v306 = vunpack.c.l.b16 %v267
    %v307 = vunpack.c.l.b16 %v268
    %v308 = vunpack.c.l.b16 %v269
    %v309 = vunpack.c.l.b16 %v270
    %v310 = vunpack.c.l.b16 %v271
    %v311 = vunpack.c.l.b16 %v272
    %v312 = vunpack.c.l.b16 %v273
    %v313 = vunpack.c.l.b16 %v274
    %v314 = vunpack.c.l.b16 %v275
    %v315 = vunpack.c.l.b16 %v276
    %v316 = vpack.c.b16 %v301, %v300
    %v317 = vpack.c.b16 %v303, %v302
    %v318 = vpack.c.b16 %v305, %v304
    %v319 = vpack.c.b16 %v307, %v306
    %v320 = vpack.c.b16 %v309, %v308
    %v321 = vpack.c.b16 %v311, %v310
    %v322 = vpack.c.b16 %v313, %v312
    %v323 = vpack.c.b16 %v315, %v314
    %332 = vmatprep.subr.bf16.mxu0 0
    %333 = vmatpush1.bf16.msra.mxu0 %v316
    %334 = vmatprep.subr.bf16.mxu0 0
    %335 = vmatpush1.bf16.msra.mxu0 %v317
    %336 = vmatprep.subr.bf16.mxu0 0
    %337 = vmatpush1.bf16.msra.mxu0 %v318
    %338 = vmatprep.subr.bf16.mxu0 0
    %339 = vmatpush1.bf16.msra.mxu0 %v319
    %340 = vmatprep.subr.bf16.mxu0 0
    %341 = vmatpush1.bf16.msra.mxu0 %v320
    %342 = vmatprep.subr.bf16.mxu0 0
    %343 = vmatpush1.bf16.msra.mxu0 %v321
    %344 = vmatprep.subr.bf16.mxu0 0
    %345 = vmatpush1.bf16.msra.mxu0 %v322
    %346 = vmatprep.subr.bf16.mxu0 0
    %347 = vmatpush1.bf16.msra.mxu0 %v323
    %348 = vmatprep.subr.bf16.mxu0 0
    %349 = vmatpush1.bf16.msra.mxu0 0
    %350 = vmatprep.subr.bf16.mxu0 0
    %351 = vmatpush1.bf16.msra.mxu0 0
    %352 = vmatprep.subr.bf16.mxu0 0
    %353 = vmatpush1.bf16.msra.mxu0 0
    %354 = vmatprep.subr.bf16.mxu0 0
    %355 = vmatpush1.bf16.msra.mxu0 0
    %356 = vmatprep.subr.bf16.mxu0 0
    %357 = vmatpush1.bf16.msra.mxu0 0
    %358 = vmatprep.subr.bf16.mxu0 0
    %359 = vmatpush1.bf16.msra.mxu0 0
    %360 = vmatprep.subr.bf16.mxu0 0
    %361 = vmatpush1.bf16.msra.mxu0 0
    %362 = vmatprep.subr.bf16.mxu0 0
    %363 = vmatpush1.bf16.msra.mxu0 0
    %364 = vmatprep.mubr.bf16.mxu0 0
    %365 = vmatmul.mubr.bf16.gmra.mrb[0].mxu0 %v253
    %v366 = vpop.f32.mrb[0].mxu0
    %v367 = vadd.f32 %v282, %v366
    %v368 = vpop.f32.mrb[0].mxu0
    %v369 = vpop.f32.mrb[0].mxu0
    %v370 = vadd.f32 %v282, %v369
    %v371 = vpop.f32.mrb[0].mxu0
    %372 = vmatprep.mubr.bf16.mxu0 0
    %373 = vmatmul.mubr.bf16.gmra.mrb[0].mxu0 %v254
    %v374 = vpop.f32.mrb[0].mxu0
    %v375 = vadd.f32 %v282, %v374
    %v376 = vpop.f32.mrb[0].mxu0
    %v377 = vpop.f32.mrb[0].mxu0
    %v378 = vadd.f32 %v282, %v377
    %v379 = vpop.f32.mrb[0].mxu0
    %380 = vmatprep.mubr.bf16.mxu0 0
    %381 = vmatmul.mubr.bf16.gmra.mrb[0].mxu0 %v255
    %v382 = vpop.f32.mrb[0].mxu0
    %v383 = vadd.f32 %v282, %v382
    %v384 = vpop.f32.mrb[0].mxu0
    %v385 = vpop.f32.mrb[0].mxu0
    %v386 = vadd.f32 %v282, %v385
    %v387 = vpop.f32.mrb[0].mxu0
    %388 = vmatprep.mubr.bf16.mxu0 0
    %389 = vmatmul.mubr.bf16.gmra.mrb[0].mxu0 %v256
    %v390 = vpop.f32.mrb[0].mxu0
    %v391 = vadd.f32 %v282, %v390
    %v392 = vpop.f32.mrb[0].mxu0
    %v393 = vpop.f32.mrb[0].mxu0
    %v394 = vadd.f32 %v282, %v393
    %v395 = vpop.f32.mrb[0].mxu0
    %396 = vmatprep.mubr.bf16.mxu0 0
    %397 = vmatmul.mubr.bf16.gmra.mrb[0].mxu0 %v257
    %v398 = vpop.f32.mrb[0].mxu0
    %v399 = vadd.f32 %v282, %v398
    %v400 = vpop.f32.mrb[0].mxu0
    %v401 = vpop.f32.mrb[0].mxu0
    %v402 = vadd.f32 %v282, %v401
    %v403 = vpop.f32.mrb[0].mxu0
    %404 = vmatprep.mubr.bf16.mxu0 0
    %405 = vmatmul.mubr.bf16.gmra.mrb[0].mxu0 %v258
    %v406 = vpop.f32.mrb[0].mxu0
    %v407 = vadd.f32 %v282, %v406
    %v408 = vpop.f32.mrb[0].mxu0
    %v409 = vpop.f32.mrb[0].mxu0
    %v410 = vadd.f32 %v282, %v409
    %v411 = vpop.f32.mrb[0].mxu0
    %412 = vmatprep.mubr.bf16.mxu0 0
    %413 = vmatmul.mubr.bf16.gmra.mrb[0].mxu0 %v259
    %v414 = vpop.f32.mrb[0].mxu0
    %v415 = vadd.f32 %v282, %v414
    %v416 = vpop.f32.mrb[0].mxu0
    %v417 = vpop.f32.mrb[0].mxu0
    %v418 = vadd.f32 %v282, %v417
    %v419 = vpop.f32.mrb[0].mxu0
    %420 = vmatprep.mubr.bf16.mxu0 0
    %421 = vmatmul.mubr.bf16.gmra.mrb[0].mxu0 %v260
    %v422 = vpop.f32.mrb[0].mxu0
    %v423 = vadd.f32 %v282, %v422
    %v424 = vpop.f32.mrb[0].mxu0
    %v425 = vpop.f32.mrb[0].mxu0
    %v426 = vadd.f32 %v282, %v425
    %v427 = vpop.f32.mrb[0].mxu0
    %428 = vdwg.mxu0
    %v429 = vmax.f32 %v367, 0.0
    %v430 = vmax.f32 %v370, 0.0
    %v431 = vmax.f32 %v375, 0.0
    %v432 = vmax.f32 %v378, 0.0
    %v433 = vmax.f32 %v383, 0.0
    %v434 = vmax.f32 %v386, 0.0
    %v435 = vmax.f32 %v391, 0.0
    %v436 = vmax.f32 %v394, 0.0
    %v437 = vmax.f32 %v399, 0.0
    %v438 = vmax.f32 %v402, 0.0
    %v439 = vmax.f32 %v407, 0.0
    %v440 = vmax.f32 %v410, 0.0
    %v441 = vmax.f32 %v415, 0.0
    %v442 = vmax.f32 %v418, 0.0
    %v443 = vmax.f32 %v423, 0.0
    %v444 = vmax.f32 %v426, 0.0
    %v445 = vpack.c.bf16 %v430, %v429
    %v446 = vpack.c.bf16 %v432, %v431
    %v447 = vpack.c.bf16 %v434, %v433
    %v448 = vpack.c.bf16 %v436, %v435
    %v449 = vpack.c.bf16 %v438, %v437
    %v450 = vpack.c.bf16 %v440, %v439
    %v451 = vpack.c.bf16 %v442, %v441
    %v452 = vpack.c.bf16 %v444, %v443
    %453 = vmatprep.subr.bf16.mxu0 0
    %454 = vmatpush1.bf16.msra.mxu0 %v445
    %455 = vmatprep.subr.bf16.mxu0 0
    %456 = vmatpush1.bf16.msra.mxu0 %v446
    %457 = vmatprep.subr.bf16.mxu0 0
    %458 = vmatpush1.bf16.msra.mxu0 %v447
    %459 = vmatprep.subr.bf16.mxu0 0
    %460 = vmatpush1.bf16.msra.mxu0 %v448
    %461 = vmatprep.subr.bf16.mxu0 0
    %462 = vmatpush1.bf16.msra.mxu0 %v449
    %463 = vmatprep.subr.bf16.mxu0 0
    %464 = vmatpush1.bf16.msra.mxu0 %v450
    %465 = vmatprep.subr.bf16.mxu0 0
    %466 = vmatpush1.bf16.msra.mxu0 %v451
    %467 = vmatprep.subr.bf16.mxu0 0
    %468 = vmatpush1.bf16.msra.mxu0 %v452
    %469 = vmatprep.subr.bf16.mxu0 0
    %470 = vmatpush1.bf16.msra.mxu0 0
    %471 = vmatprep.subr.bf16.mxu0 0
    %472 = vmatpush1.bf16.msra.mxu0 0
    %473 = vmatprep.subr.bf16.mxu0 0
    %474 = vmatpush1.bf16.msra.mxu0 0
    %475 = vmatprep.subr.bf16.mxu0 0
    %476 = vmatpush1.bf16.msra.mxu0 0
    %477 = vmatprep.subr.bf16.mxu0 0
    %478 = vmatpush1.bf16.msra.mxu0 0
    %479 = vmatprep.subr.bf16.mxu0 0
    %480 = vmatpush1.bf16.msra.mxu0 0
    %481 = vmatprep.subr.bf16.mxu0 0
    %482 = vmatpush1.bf16.msra.mxu0 0
    %483 = vmatprep.subr.bf16.mxu0 0
    %484 = vmatpush1.bf16.msra.mxu0 0
    %485 = vmatprep.mubr.bf16.mxu0 0
    %486 = vmatmul.mubr.bf16.gmra.mrb[0].mxu0 %v92
    %v487 = vpop.f32.mrb[0].mxu0
    %v488 = vadd.f32 0.0, %v487
    %v489 = vpop.f32.mrb[0].mxu0
    %v490 = vpop.f32.mrb[0].mxu0
    %v491 = vadd.f32 0.0, %v490
    %v492 = vpop.f32.mrb[0].mxu0
    %493 = vmatprep.mubr.bf16.mxu0 0
    %494 = vmatmul.mubr.bf16.gmra.mrb[0].mxu0 %v93
    %v495 = vpop.f32.mrb[0].mxu0
    %v496 = vadd.f32 0.0, %v495
    %v497 = vpop.f32.mrb[0].mxu0
    %v498 = vpop.f32.mrb[0].mxu0
    %v499 = vadd.f32 0.0, %v498
    %v500 = vpop.f32.mrb[0].mxu0
    %501 = vmatprep.mubr.bf16.mxu0 0
    %502 = vmatmul.mubr.bf16.gmra.mrb[0].mxu0 %v94
    %v503 = vpop.f32.mrb[0].mxu0
    %v504 = vadd.f32 0.0, %v503
    %v505 = vpop.f32.mrb[0].mxu0
    %v506 = vpop.f32.mrb[0].mxu0
    %v507 = vadd.f32 0.0, %v506
    %v508 = vpop.f32.mrb[0].mxu0
    %509 = vmatprep.mubr.bf16.mxu0 0
    %510 = vmatmul.mubr.bf16.gmra.mrb[0].mxu0 %v95
    %v511 = vpop.f32.mrb[0].mxu0
    %v512 = vadd.f32 0.0, %v511
    %v513 = vpop.f32.mrb[0].mxu0
    %v514 = vpop.f32.mrb[0].mxu0
    %v515 = vadd.f32 0.0, %v514
    %v516 = vpop.f32.mrb[0].mxu0
    %517 = vmatprep.mubr.bf16.mxu0 0
    %518 = vmatmul.mubr.bf16.gmra.mrb[0].mxu0 %v96
    %v519 = vpop.f32.mrb[0].mxu0
    %v520 = vadd.f32 0.0, %v519
    %v521 = vpop.f32.mrb[0].mxu0
    %v522 = vpop.f32.mrb[0].mxu0
    %v523 = vadd.f32 0.0, %v522
    %v524 = vpop.f32.mrb[0].mxu0
    %525 = vmatprep.mubr.bf16.mxu0 0
    %526 = vmatmul.mubr.bf16.gmra.mrb[0].mxu0 %v97
    %v527 = vpop.f32.mrb[0].mxu0
    %v528 = vadd.f32 0.0, %v527
    %v529 = vpop.f32.mrb[0].mxu0
    %v530 = vpop.f32.mrb[0].mxu0
    %v531 = vadd.f32 0.0, %v530
    %v532 = vpop.f32.mrb[0].mxu0
    %533 = vmatprep.mubr.bf16.mxu0 0
    %534 = vmatmul.mubr.bf16.gmra.mrb[0].mxu0 %v98
    %v535 = vpop.f32.mrb[0].mxu0
    %v536 = vadd.f32 0.0, %v535
    %v537 = vpop.f32.mrb[0].mxu0
    %v538 = vpop.f32.mrb[0].mxu0
    %v539 = vadd.f32 0.0, %v538
    %v540 = vpop.f32.mrb[0].mxu0
    %541 = vmatprep.mubr.bf16.mxu0 0
    %542 = vmatmul.mubr.bf16.gmra.mrb[0].mxu0 %v99
    %v543 = vpop.f32.mrb[0].mxu0
    %v544 = vadd.f32 0.0, %v543
    %v545 = vpop.f32.mrb[0].mxu0
    %v546 = vpop.f32.mrb[0].mxu0
    %v547 = vadd.f32 0.0, %v546
    %v548 = vpop.f32.mrb[0].mxu0
    %549 = vdwg.mxu0
    %v550 = vpack.c.bf16 %v491, %v488
    %v551 = vpack.c.bf16 %v499, %v496
    %v552 = vpack.c.bf16 %v507, %v504
    %v553 = vpack.c.bf16 %v515, %v512
    %v554 = vpack.c.bf16 %v523, %v520
    %v555 = vpack.c.bf16 %v531, %v528
    %v556 = vpack.c.bf16 %v539, %v536
    %v557 = vpack.c.bf16 %v547, %v544
    %s558 = scalar_lea.vmem %s2, 64
    %v559 = vld [vmem:[%s558] sm:$0xf]
    %v560 = vld [vmem:[%s558 + $0x4] sm:$0xf]
    %v561 = vld [vmem:[%s558 + $0x8] sm:$0xf]
    %v562 = vld [vmem:[%s558 + $0xc] sm:$0xf]
    %v563 = vld [vmem:[%s558 + $0x10] sm:$0xf]
    %v564 = vld [vmem:[%s558 + $0x14] sm:$0xf]
    %v565 = vld [vmem:[%s558 + $0x18] sm:$0xf]
    %v566 = vld [vmem:[%s558 + $0x1c] sm:$0xf]
    %v567 = vld [vmem:[%s558 + $0x20] sm:$0xf]
    %v568 = vld [vmem:[%s558 + $0x24] sm:$0xf]
    %v569 = vld [vmem:[%s558 + $0x28] sm:$0xf]
    %v570 = vld [vmem:[%s558 + $0x2c] sm:$0xf]
    %v571 = vld [vmem:[%s558 + $0x30] sm:$0xf]
    %v572 = vld [vmem:[%s558 + $0x34] sm:$0xf]
    %v573 = vld [vmem:[%s558 + $0x38] sm:$0xf]
    %v574 = vld [vmem:[%s558 + $0x3c] sm:$0xf]
    %s575 = scalar_lea.vmem %s3, 1
    %v576 = vld [vmem:[%s575] sm:$0x1]
    %v578 = vlaneseq
    %v579 = vshrl.u32 %v578, 7
    %v580 = vsub.s32 0, %v579
    %v581 = vrot.slane %v576, %v580
    %v599 = vunpack.c.l.b16 %v559
    %v600 = vunpack.c.l.b16 %v560
    %v601 = vunpack.c.l.b16 %v561
    %v602 = vunpack.c.l.b16 %v562
    %v603 = vunpack.c.l.b16 %v563
    %v604 = vunpack.c.l.b16 %v564
    %v605 = vunpack.c.l.b16 %v565
    %v606 = vunpack.c.l.b16 %v566
    %v607 = vunpack.c.l.b16 %v567
    %v608 = vunpack.c.l.b16 %v568
    %v609 = vunpack.c.l.b16 %v569
    %v610 = vunpack.c.l.b16 %v570
    %v611 = vunpack.c.l.b16 %v571
    %v612 = vunpack.c.l.b16 %v572
    %v613 = vunpack.c.l.b16 %v573
    %v614 = vunpack.c.l.b16 %v574
    %v615 = vpack.c.b16 %v600, %v599
    %v616 = vpack.c.b16 %v602, %v601
    %v617 = vpack.c.b16 %v604, %v603
    %v618 = vpack.c.b16 %v606, %v605
    %v619 = vpack.c.b16 %v608, %v607
    %v620 = vpack.c.b16 %v610, %v609
    %v621 = vpack.c.b16 %v612, %v611
    %v622 = vpack.c.b16 %v614, %v613
    %631 = vmatprep.subr.bf16.mxu0 0
    %632 = vmatpush1.bf16.msra.mxu0 %v615
    %633 = vmatprep.subr.bf16.mxu0 0
    %634 = vmatpush1.bf16.msra.mxu0 %v616
    %635 = vmatprep.subr.bf16.mxu0 0
    %636 = vmatpush1.bf16.msra.mxu0 %v617
    %637 = vmatprep.subr.bf16.mxu0 0
    %638 = vmatpush1.bf16.msra.mxu0 %v618
    %639 = vmatprep.subr.bf16.mxu0 0
    %640 = vmatpush1.bf16.msra.mxu0 %v619
    %641 = vmatprep.subr.bf16.mxu0 0
    %642 = vmatpush1.bf16.msra.mxu0 %v620
    %643 = vmatprep.subr.bf16.mxu0 0
    %644 = vmatpush1.bf16.msra.mxu0 %v621
    %645 = vmatprep.subr.bf16.mxu0 0
    %646 = vmatpush1.bf16.msra.mxu0 %v622
    %647 = vmatprep.subr.bf16.mxu0 0
    %648 = vmatpush1.bf16.msra.mxu0 0
    %649 = vmatprep.subr.bf16.mxu0 0
    %650 = vmatpush1.bf16.msra.mxu0 0
    %651 = vmatprep.subr.bf16.mxu0 0
    %652 = vmatpush1.bf16.msra.mxu0 0
    %653 = vmatprep.subr.bf16.mxu0 0
    %654 = vmatpush1.bf16.msra.mxu0 0
    %655 = vmatprep.subr.bf16.mxu0 0
    %656 = vmatpush1.bf16.msra.mxu0 0
    %657 = vmatprep.subr.bf16.mxu0 0
    %658 = vmatpush1.bf16.msra.mxu0 0
    %659 = vmatprep.subr.bf16.mxu0 0
    %660 = vmatpush1.bf16.msra.mxu0 0
    %661 = vmatprep.subr.bf16.mxu0 0
    %662 = vmatpush1.bf16.msra.mxu0 0
    %663 = vmatprep.mubr.bf16.mxu0 0
    %664 = vmatmul.mubr.bf16.gmra.mrb[0].mxu0 %v550
    %v665 = vpop.f32.mrb[0].mxu0
    %v666 = vadd.f32 %v581, %v665
    %v667 = vpop.f32.mrb[0].mxu0
    %v668 = vpop.f32.mrb[0].mxu0
    %v669 = vadd.f32 %v581, %v668
    %v670 = vpop.f32.mrb[0].mxu0
    %671 = vmatprep.mubr.bf16.mxu0 0
    %672 = vmatmul.mubr.bf16.gmra.mrb[0].mxu0 %v551
    %v673 = vpop.f32.mrb[0].mxu0
    %v674 = vadd.f32 %v581, %v673
    %v675 = vpop.f32.mrb[0].mxu0
    %v676 = vpop.f32.mrb[0].mxu0
    %v677 = vadd.f32 %v581, %v676
    %v678 = vpop.f32.mrb[0].mxu0
    %679 = vmatprep.mubr.bf16.mxu0 0
    %680 = vmatmul.mubr.bf16.gmra.mrb[0].mxu0 %v552
    %v681 = vpop.f32.mrb[0].mxu0
    %v682 = vadd.f32 %v581, %v681
    %v683 = vpop.f32.mrb[0].mxu0
    %v684 = vpop.f32.mrb[0].mxu0
    %v685 = vadd.f32 %v581, %v684
    %v686 = vpop.f32.mrb[0].mxu0
    %687 = vmatprep.mubr.bf16.mxu0 0
    %688 = vmatmul.mubr.bf16.gmra.mrb[0].mxu0 %v553
    %v689 = vpop.f32.mrb[0].mxu0
    %v690 = vadd.f32 %v581, %v689
    %v691 = vpop.f32.mrb[0].mxu0
    %v692 = vpop.f32.mrb[0].mxu0
    %v693 = vadd.f32 %v581, %v692
    %v694 = vpop.f32.mrb[0].mxu0
    %695 = vmatprep.mubr.bf16.mxu0 0
    %696 = vmatmul.mubr.bf16.gmra.mrb[0].mxu0 %v554
    %v697 = vpop.f32.mrb[0].mxu0
    %v698 = vadd.f32 %v581, %v697
    %v699 = vpop.f32.mrb[0].mxu0
    %v700 = vpop.f32.mrb[0].mxu0
    %v701 = vadd.f32 %v581, %v700
    %v702 = vpop.f32.mrb[0].mxu0
    %703 = vmatprep.mubr.bf16.mxu0 0
    %704 = vmatmul.mubr.bf16.gmra.mrb[0].mxu0 %v555
    %v705 = vpop.f32.mrb[0].mxu0
    %v706 = vadd.f32 %v581, %v705
    %v707 = vpop.f32.mrb[0].mxu0
    %v708 = vpop.f32.mrb[0].mxu0
    %v709 = vadd.f32 %v581, %v708
    %v710 = vpop.f32.mrb[0].mxu0
    %711 = vmatprep.mubr.bf16.mxu0 0
    %712 = vmatmul.mubr.bf16.gmra.mrb[0].mxu0 %v556
    %v713 = vpop.f32.mrb[0].mxu0
    %v714 = vadd.f32 %v581, %v713
    %v715 = vpop.f32.mrb[0].mxu0
    %v716 = vpop.f32.mrb[0].mxu0
    %v717 = vadd.f32 %v581, %v716
    %v718 = vpop.f32.mrb[0].mxu0
    %719 = vmatprep.mubr.bf16.mxu0 0
    %720 = vmatmul.mubr.bf16.gmra.mrb[0].mxu0 %v557
    %v721 = vpop.f32.mrb[0].mxu0
    %v722 = vadd.f32 %v581, %v721
    %v723 = vpop.f32.mrb[0].mxu0
    %v724 = vpop.f32.mrb[0].mxu0
    %v725 = vadd.f32 %v581, %v724
    %v726 = vpop.f32.mrb[0].mxu0
    %727 = vdwg.mxu0
    %v728 = vmax.f32 %v666, 0.0
    %v729 = vmax.f32 %v669, 0.0
    %v730 = vmax.f32 %v674, 0.0
    %v731 = vmax.f32 %v677, 0.0
    %v732 = vmax.f32 %v682, 0.0
    %v733 = vmax.f32 %v685, 0.0
    %v734 = vmax.f32 %v690, 0.0
    %v735 = vmax.f32 %v693, 0.0
    %v736 = vmax.f32 %v698, 0.0
    %v737 = vmax.f32 %v701, 0.0
    %v738 = vmax.f32 %v706, 0.0
    %v739 = vmax.f32 %v709, 0.0
    %v740 = vmax.f32 %v714, 0.0
    %v741 = vmax.f32 %v717, 0.0
    %v742 = vmax.f32 %v722, 0.0
    %v743 = vmax.f32 %v725, 0.0
    %v744 = vpack.c.bf16 %v729, %v728
    %v745 = vpack.c.bf16 %v731, %v730
    %v746 = vpack.c.bf16 %v733, %v732
    %v747 = vpack.c.bf16 %v735, %v734
    %v748 = vpack.c.bf16 %v737, %v736
    %v749 = vpack.c.bf16 %v739, %v738
    %v750 = vpack.c.bf16 %v741, %v740
    %v751 = vpack.c.bf16 %v743, %v742
    %752 = vmatprep.subr.bf16.mxu0 0
    %753 = vmatpush1.bf16.msra.mxu0 %v744
    %754 = vmatprep.subr.bf16.mxu0 0
    %755 = vmatpush1.bf16.msra.mxu0 %v745
    %756 = vmatprep.subr.bf16.mxu0 0
    %757 = vmatpush1.bf16.msra.mxu0 %v746
    %758 = vmatprep.subr.bf16.mxu0 0
    %759 = vmatpush1.bf16.msra.mxu0 %v747
    %760 = vmatprep.subr.bf16.mxu0 0
    %761 = vmatpush1.bf16.msra.mxu0 %v748
    %762 = vmatprep.subr.bf16.mxu0 0
    %763 = vmatpush1.bf16.msra.mxu0 %v749
    %764 = vmatprep.subr.bf16.mxu0 0
    %765 = vmatpush1.bf16.msra.mxu0 %v750
    %766 = vmatprep.subr.bf16.mxu0 0
    %767 = vmatpush1.bf16.msra.mxu0 %v751
    %768 = vmatprep.subr.bf16.mxu0 0
    %769 = vmatpush1.bf16.msra.mxu0 0
    %770 = vmatprep.subr.bf16.mxu0 0
    %771 = vmatpush1.bf16.msra.mxu0 0
    %772 = vmatprep.subr.bf16.mxu0 0
    %773 = vmatpush1.bf16.msra.mxu0 0
    %774 = vmatprep.subr.bf16.mxu0 0
    %775 = vmatpush1.bf16.msra.mxu0 0
    %776 = vmatprep.subr.bf16.mxu0 0
    %777 = vmatpush1.bf16.msra.mxu0 0
    %778 = vmatprep.subr.bf16.mxu0 0
    %779 = vmatpush1.bf16.msra.mxu0 0
    %780 = vmatprep.subr.bf16.mxu0 0
    %781 = vmatpush1.bf16.msra.mxu0 0
    %782 = vmatprep.subr.bf16.mxu0 0
    %783 = vmatpush1.bf16.msra.mxu0 0
    %784 = vmatprep.mubr.bf16.mxu0 0
    %785 = vmatmul.mubr.bf16.gmra.mrb[0].mxu0 %v92
    %v786 = vpop.f32.mrb[0].mxu0
    %v787 = vadd.f32 0.0, %v786
    %v788 = vpop.f32.mrb[0].mxu0
    %v789 = vpop.f32.mrb[0].mxu0
    %v790 = vadd.f32 0.0, %v789
    %v791 = vpop.f32.mrb[0].mxu0
    %792 = vmatprep.mubr.bf16.mxu0 0
    %793 = vmatmul.mubr.bf16.gmra.mrb[0].mxu0 %v93
    %v794 = vpop.f32.mrb[0].mxu0
    %v795 = vadd.f32 0.0, %v794
    %v796 = vpop.f32.mrb[0].mxu0
    %v797 = vpop.f32.mrb[0].mxu0
    %v798 = vadd.f32 0.0, %v797
    %v799 = vpop.f32.mrb[0].mxu0
    %800 = vmatprep.mubr.bf16.mxu0 0
    %801 = vmatmul.mubr.bf16.gmra.mrb[0].mxu0 %v94
    %v802 = vpop.f32.mrb[0].mxu0
    %v803 = vadd.f32 0.0, %v802
    %v804 = vpop.f32.mrb[0].mxu0
    %v805 = vpop.f32.mrb[0].mxu0
    %v806 = vadd.f32 0.0, %v805
    %v807 = vpop.f32.mrb[0].mxu0
    %808 = vmatprep.mubr.bf16.mxu0 0
    %809 = vmatmul.mubr.bf16.gmra.mrb[0].mxu0 %v95
    %v810 = vpop.f32.mrb[0].mxu0
    %v811 = vadd.f32 0.0, %v810
    %v812 = vpop.f32.mrb[0].mxu0
    %v813 = vpop.f32.mrb[0].mxu0
    %v814 = vadd.f32 0.0, %v813
    %v815 = vpop.f32.mrb[0].mxu0
    %816 = vmatprep.mubr.bf16.mxu0 0
    %817 = vmatmul.mubr.bf16.gmra.mrb[0].mxu0 %v96
    %v818 = vpop.f32.mrb[0].mxu0
    %v819 = vadd.f32 0.0, %v818
    %v820 = vpop.f32.mrb[0].mxu0
    %v821 = vpop.f32.mrb[0].mxu0
    %v822 = vadd.f32 0.0, %v821
    %v823 = vpop.f32.mrb[0].mxu0
    %824 = vmatprep.mubr.bf16.mxu0 0
    %825 = vmatmul.mubr.bf16.gmra.mrb[0].mxu0 %v97
    %v826 = vpop.f32.mrb[0].mxu0
    %v827 = vadd.f32 0.0, %v826
    %v828 = vpop.f32.mrb[0].mxu0
    %v829 = vpop.f32.mrb[0].mxu0
    %v830 = vadd.f32 0.0, %v829
    %v831 = vpop.f32.mrb[0].mxu0
    %832 = vmatprep.mubr.bf16.mxu0 0
    %833 = vmatmul.mubr.bf16.gmra.mrb[0].mxu0 %v98
    %v834 = vpop.f32.mrb[0].mxu0
    %v835 = vadd.f32 0.0, %v834
    %v836 = vpop.f32.mrb[0].mxu0
    %v837 = vpop.f32.mrb[0].mxu0
    %v838 = vadd.f32 0.0, %v837
    %v839 = vpop.f32.mrb[0].mxu0
    %840 = vmatprep.mubr.bf16.mxu0 0
    %841 = vmatmul.mubr.bf16.gmra.mrb[0].mxu0 %v99
    %v842 = vpop.f32.mrb[0].mxu0
    %v843 = vadd.f32 0.0, %v842
    %v844 = vpop.f32.mrb[0].mxu0
    %v845 = vpop.f32.mrb[0].mxu0
    %v846 = vadd.f32 0.0, %v845
    %v847 = vpop.f32.mrb[0].mxu0
    %848 = vdwg.mxu0
    %v849 = vpack.c.bf16 %v790, %v787
    %v850 = vpack.c.bf16 %v798, %v795
    %v851 = vpack.c.bf16 %v806, %v803
    %v852 = vpack.c.bf16 %v814, %v811
    %v853 = vpack.c.bf16 %v822, %v819
    %v854 = vpack.c.bf16 %v830, %v827
    %v855 = vpack.c.bf16 %v838, %v835
    %v856 = vpack.c.bf16 %v846, %v843
    %s857 = scalar_lea.vmem %s2, 128
    %v858 = vld [vmem:[%s857] sm:$0xf]
    %v859 = vld [vmem:[%s857 + $0x4] sm:$0xf]
    %v860 = vld [vmem:[%s857 + $0x8] sm:$0xf]
    %v861 = vld [vmem:[%s857 + $0xc] sm:$0xf]
    %v862 = vld [vmem:[%s857 + $0x10] sm:$0xf]
    %v863 = vld [vmem:[%s857 + $0x14] sm:$0xf]
    %v864 = vld [vmem:[%s857 + $0x18] sm:$0xf]
    %v865 = vld [vmem:[%s857 + $0x1c] sm:$0xf]
    %v866 = vld [vmem:[%s857 + $0x20] sm:$0xf]
    %v867 = vld [vmem:[%s857 + $0x24] sm:$0xf]
    %v868 = vld [vmem:[%s857 + $0x28] sm:$0xf]
    %v869 = vld [vmem:[%s857 + $0x2c] sm:$0xf]
    %v870 = vld [vmem:[%s857 + $0x30] sm:$0xf]
    %v871 = vld [vmem:[%s857 + $0x34] sm:$0xf]
    %v872 = vld [vmem:[%s857 + $0x38] sm:$0xf]
    %v873 = vld [vmem:[%s857 + $0x3c] sm:$0xf]
    %s874 = scalar_lea.vmem %s3, 2
    %v875 = vld [vmem:[%s874] sm:$0x1]
    %v877 = vlaneseq
    %v878 = vshrl.u32 %v877, 7
    %v879 = vsub.s32 0, %v878
    %v880 = vrot.slane %v875, %v879
    %v898 = vunpack.c.l.b16 %v858
    %v899 = vunpack.c.l.b16 %v859
    %v900 = vunpack.c.l.b16 %v860
    %v901 = vunpack.c.l.b16 %v861
    %v902 = vunpack.c.l.b16 %v862
    %v903 = vunpack.c.l.b16 %v863
    %v904 = vunpack.c.l.b16 %v864
    %v905 = vunpack.c.l.b16 %v865
    %v906 = vunpack.c.l.b16 %v866
    %v907 = vunpack.c.l.b16 %v867
    %v908 = vunpack.c.l.b16 %v868
    %v909 = vunpack.c.l.b16 %v869
    %v910 = vunpack.c.l.b16 %v870
    %v911 = vunpack.c.l.b16 %v871
    %v912 = vunpack.c.l.b16 %v872
    %v913 = vunpack.c.l.b16 %v873
    %v914 = vpack.c.b16 %v899, %v898
    %v915 = vpack.c.b16 %v901, %v900
    %v916 = vpack.c.b16 %v903, %v902
    %v917 = vpack.c.b16 %v905, %v904
    %v918 = vpack.c.b16 %v907, %v906
    %v919 = vpack.c.b16 %v909, %v908
    %v920 = vpack.c.b16 %v911, %v910
    %v921 = vpack.c.b16 %v913, %v912
    %930 = vmatprep.subr.bf16.mxu0 0
    %931 = vmatpush1.bf16.msra.mxu0 %v914
    %932 = vmatprep.subr.bf16.mxu0 0
    %933 = vmatpush1.bf16.msra.mxu0 %v915
    %934 = vmatprep.subr.bf16.mxu0 0
    %935 = vmatpush1.bf16.msra.mxu0 %v916
    %936 = vmatprep.subr.bf16.mxu0 0
    %937 = vmatpush1.bf16.msra.mxu0 %v917
    %938 = vmatprep.subr.bf16.mxu0 0
    %939 = vmatpush1.bf16.msra.mxu0 %v918
    %940 = vmatprep.subr.bf16.mxu0 0
    %941 = vmatpush1.bf16.msra.mxu0 %v919
    %942 = vmatprep.subr.bf16.mxu0 0
    %943 = vmatpush1.bf16.msra.mxu0 %v920
    %944 = vmatprep.subr.bf16.mxu0 0
    %945 = vmatpush1.bf16.msra.mxu0 %v921
    %946 = vmatprep.subr.bf16.mxu0 0
    %947 = vmatpush1.bf16.msra.mxu0 0
    %948 = vmatprep.subr.bf16.mxu0 0
    %949 = vmatpush1.bf16.msra.mxu0 0
    %950 = vmatprep.subr.bf16.mxu0 0
    %951 = vmatpush1.bf16.msra.mxu0 0
    %952 = vmatprep.subr.bf16.mxu0 0
    %953 = vmatpush1.bf16.msra.mxu0 0
    %954 = vmatprep.subr.bf16.mxu0 0
    %955 = vmatpush1.bf16.msra.mxu0 0
    %956 = vmatprep.subr.bf16.mxu0 0
    %957 = vmatpush1.bf16.msra.mxu0 0
    %958 = vmatprep.subr.bf16.mxu0 0
    %959 = vmatpush1.bf16.msra.mxu0 0
    %960 = vmatprep.subr.bf16.mxu0 0
    %961 = vmatpush1.bf16.msra.mxu0 0
    %962 = vmatprep.mubr.bf16.mxu0 0
    %963 = vmatmul.mubr.bf16.gmra.mrb[0].mxu0 %v849
    %v964 = vpop.f32.mrb[0].mxu0
    %v965 = vadd.f32 %v880, %v964
    %v966 = vpop.f32.mrb[0].mxu0
    %v967 = vpop.f32.mrb[0].mxu0
    %v968 = vadd.f32 %v880, %v967
    %v969 = vpop.f32.mrb[0].mxu0
    %970 = vmatprep.mubr.bf16.mxu0 0
    %971 = vmatmul.mubr.bf16.gmra.mrb[0].mxu0 %v850
    %v972 = vpop.f32.mrb[0].mxu0
    %v973 = vadd.f32 %v880, %v972
    %v974 = vpop.f32.mrb[0].mxu0
    %v975 = vpop.f32.mrb[0].mxu0
    %v976 = vadd.f32 %v880, %v975
    %v977 = vpop.f32.mrb[0].mxu0
    %978 = vmatprep.mubr.bf16.mxu0 0
    %979 = vmatmul.mubr.bf16.gmra.mrb[0].mxu0 %v851
    %v980 = vpop.f32.mrb[0].mxu0
    %v981 = vadd.f32 %v880, %v980
    %v982 = vpop.f32.mrb[0].mxu0
    %v983 = vpop.f32.mrb[0].mxu0
    %v984 = vadd.f32 %v880, %v983
    %v985 = vpop.f32.mrb[0].mxu0
    %986 = vmatprep.mubr.bf16.mxu0 0
    %987 = vmatmul.mubr.bf16.gmra.mrb[0].mxu0 %v852
    %v988 = vpop.f32.mrb[0].mxu0
    %v989 = vadd.f32 %v880, %v988
    %v990 = vpop.f32.mrb[0].mxu0
    %v991 = vpop.f32.mrb[0].mxu0
    %v992 = vadd.f32 %v880, %v991
    %v993 = vpop.f32.mrb[0].mxu0
    %994 = vmatprep.mubr.bf16.mxu0 0
    %995 = vmatmul.mubr.bf16.gmra.mrb[0].mxu0 %v853
    %v996 = vpop.f32.mrb[0].mxu0
    %v997 = vadd.f32 %v880, %v996
    %v998 = vpop.f32.mrb[0].mxu0
    %v999 = vpop.f32.mrb[0].mxu0
    %v1000 = vadd.f32 %v880, %v999
    %v1001 = vpop.f32.mrb[0].mxu0
    %1002 = vmatprep.mubr.bf16.mxu0 0
    %1003 = vmatmul.mubr.bf16.gmra.mrb[0].mxu0 %v854
    %v1004 = vpop.f32.mrb[0].mxu0
    %v1005 = vadd.f32 %v880, %v1004
    %v1006 = vpop.f32.mrb[0].mxu0
    %v1007 = vpop.f32.mrb[0].mxu0
    %v1008 = vadd.f32 %v880, %v1007
    %v1009 = vpop.f32.mrb[0].mxu0
    %1010 = vmatprep.mubr.bf16.mxu0 0
    %1011 = vmatmul.mubr.bf16.gmra.mrb[0].mxu0 %v855
    %v1012 = vpop.f32.mrb[0].mxu0
    %v1013 = vadd.f32 %v880, %v1012
    %v1014 = vpop.f32.mrb[0].mxu0
    %v1015 = vpop.f32.mrb[0].mxu0
    %v1016 = vadd.f32 %v880, %v1015
    %v1017 = vpop.f32.mrb[0].mxu0
    %1018 = vmatprep.mubr.bf16.mxu0 0
    %1019 = vmatmul.mubr.bf16.gmra.mrb[0].mxu0 %v856
    %v1020 = vpop.f32.mrb[0].mxu0
    %v1021 = vadd.f32 %v880, %v1020
    %v1022 = vpop.f32.mrb[0].mxu0
    %v1023 = vpop.f32.mrb[0].mxu0
    %v1024 = vadd.f32 %v880, %v1023
    %v1025 = vpop.f32.mrb[0].mxu0
    %1026 = vdwg.mxu0
    %v1027 = vmax.f32 %v965, 0.0
    %v1028 = vmax.f32 %v968, 0.0
    %v1029 = vmax.f32 %v973, 0.0
    %v1030 = vmax.f32 %v976, 0.0
    %v1031 = vmax.f32 %v981, 0.0
    %v1032 = vmax.f32 %v984, 0.0
    %v1033 = vmax.f32 %v989, 0.0
    %v1034 = vmax.f32 %v992, 0.0
    %v1035 = vmax.f32 %v997, 0.0
    %v1036 = vmax.f32 %v1000, 0.0
    %v1037 = vmax.f32 %v1005, 0.0
    %v1038 = vmax.f32 %v1008, 0.0
    %v1039 = vmax.f32 %v1013, 0.0
    %v1040 = vmax.f32 %v1016, 0.0
    %v1041 = vmax.f32 %v1021, 0.0
    %v1042 = vmax.f32 %v1024, 0.0
    %v1043 = vpack.c.bf16 %v1028, %v1027
    %v1044 = vpack.c.bf16 %v1030, %v1029
    %v1045 = vpack.c.bf16 %v1032, %v1031
    %v1046 = vpack.c.bf16 %v1034, %v1033
    %v1047 = vpack.c.bf16 %v1036, %v1035
    %v1048 = vpack.c.bf16 %v1038, %v1037
    %v1049 = vpack.c.bf16 %v1040, %v1039
    %v1050 = vpack.c.bf16 %v1042, %v1041
    %v1051 = vld [vmem:[%s4] sm:$0x1]
    %1052 = vmatprep.subr.bf16.mxu0 0
    %1053 = vmatpush1.bf16.msra.mxu0 %v1043
    %1054 = vmatprep.subr.bf16.mxu0 0
    %1055 = vmatpush1.bf16.msra.mxu0 %v1044
    %1056 = vmatprep.subr.bf16.mxu0 0
    %1057 = vmatpush1.bf16.msra.mxu0 %v1045
    %1058 = vmatprep.subr.bf16.mxu0 0
    %1059 = vmatpush1.bf16.msra.mxu0 %v1046
    %1060 = vmatprep.subr.bf16.mxu0 0
    %1061 = vmatpush1.bf16.msra.mxu0 %v1047
    %1062 = vmatprep.subr.bf16.mxu0 0
    %1063 = vmatpush1.bf16.msra.mxu0 %v1048
    %1064 = vmatprep.subr.bf16.mxu0 0
    %1065 = vmatpush1.bf16.msra.mxu0 %v1049
    %1066 = vmatprep.subr.bf16.mxu0 0
    %1067 = vmatpush1.bf16.msra.mxu0 %v1050
    %1068 = vmatprep.subr.bf16.mxu0 0
    %1069 = vmatpush1.bf16.msra.mxu0 0
    %1070 = vmatprep.subr.bf16.mxu0 0
    %1071 = vmatpush1.bf16.msra.mxu0 0
    %1072 = vmatprep.subr.bf16.mxu0 0
    %1073 = vmatpush1.bf16.msra.mxu0 0
    %1074 = vmatprep.subr.bf16.mxu0 0
    %1075 = vmatpush1.bf16.msra.mxu0 0
    %1076 = vmatprep.subr.bf16.mxu0 0
    %1077 = vmatpush1.bf16.msra.mxu0 0
    %1078 = vmatprep.subr.bf16.mxu0 0
    %1079 = vmatpush1.bf16.msra.mxu0 0
    %1080 = vmatprep.subr.bf16.mxu0 0
    %1081 = vmatpush1.bf16.msra.mxu0 0
    %1082 = vmatprep.subr.bf16.mxu0 0
    %1083 = vmatpush1.bf16.msra.mxu0 0
    %1084 = vmatprep.mubr.bf16.mxu0 0
    %1085 = vmatmul.mubr.bf16.gmra.mrb[0].mxu0 %v1051
    %v1086 = vpop.f32.mrb[0].mxu0
    %v1087 = vadd.f32 0.0, %v1086
    %v1088 = vpop.f32.mrb[0].mxu0
    %v1089 = vpop.f32.mrb[0].mxu0
    %v1090 = vpop.f32.mrb[0].mxu0
    %1091 = vdwg.mxu0
    %v1092 = vpack.c.bf16 %v1087, %v1087
    %v1093 = vld [vmem:[%s5] sm:$0xf]
    %v1094 = vld [vmem:[%s5 + $0x4] sm:$0xf]
    %v1095 = vld [vmem:[%s5 + $0x8] sm:$0xf]
    %v1096 = vld [vmem:[%s5 + $0xc] sm:$0xf]
    %v1097 = vld [vmem:[%s5 + $0x10] sm:$0xf]
    %v1098 = vld [vmem:[%s5 + $0x14] sm:$0xf]
    %v1099 = vld [vmem:[%s5 + $0x18] sm:$0xf]
    %v1100 = vld [vmem:[%s5 + $0x1c] sm:$0xf]
    %v1101 = vld [vmem:[%s5 + $0x20] sm:$0xf]
    %v1102 = vld [vmem:[%s5 + $0x24] sm:$0xf]
    %v1103 = vld [vmem:[%s5 + $0x28] sm:$0xf]
    %v1104 = vld [vmem:[%s5 + $0x2c] sm:$0xf]
    %v1105 = vld [vmem:[%s5 + $0x30] sm:$0xf]
    %v1106 = vld [vmem:[%s5 + $0x34] sm:$0xf]
    %v1107 = vld [vmem:[%s5 + $0x38] sm:$0xf]
    %v1108 = vld [vmem:[%s5 + $0x3c] sm:$0xf]
    %v1109 = vld [vmem:[%s6] sm:$0x1]
    %v1111 = vlaneseq
    %v1112 = vshrl.u32 %v1111, 7
    %v1113 = vsub.s32 0, %v1112
    %v1114 = vrot.slane %v1109, %v1113
    %v1132 = vunpack.c.l.b16 %v1093
    %v1133 = vunpack.c.l.b16 %v1094
    %v1134 = vunpack.c.l.b16 %v1095
    %v1135 = vunpack.c.l.b16 %v1096
    %v1136 = vunpack.c.l.b16 %v1097
    %v1137 = vunpack.c.l.b16 %v1098
    %v1138 = vunpack.c.l.b16 %v1099
    %v1139 = vunpack.c.l.b16 %v1100
    %v1140 = vunpack.c.l.b16 %v1101
    %v1141 = vunpack.c.l.b16 %v1102
    %v1142 = vunpack.c.l.b16 %v1103
    %v1143 = vunpack.c.l.b16 %v1104
    %v1144 = vunpack.c.l.b16 %v1105
    %v1145 = vunpack.c.l.b16 %v1106
    %v1146 = vunpack.c.l.b16 %v1107
    %v1147 = vunpack.c.l.b16 %v1108
    %v1148 = vpack.c.b16 %v1133, %v1132
    %v1149 = vpack.c.b16 %v1135, %v1134
    %v1150 = vpack.c.b16 %v1137, %v1136
    %v1151 = vpack.c.b16 %v1139, %v1138
    %v1152 = vpack.c.b16 %v1141, %v1140
    %v1153 = vpack.c.b16 %v1143, %v1142
    %v1154 = vpack.c.b16 %v1145, %v1144
    %v1155 = vpack.c.b16 %v1147, %v1146
    %1164 = vmatprep.subr.bf16.mxu0 0
    %1165 = vmatpush1.bf16.msra.mxu0 %v1148
    %1166 = vmatprep.subr.bf16.mxu0 0
    %1167 = vmatpush1.bf16.msra.mxu0 %v1149
    %1168 = vmatprep.subr.bf16.mxu0 0
    %1169 = vmatpush1.bf16.msra.mxu0 %v1150
    %1170 = vmatprep.subr.bf16.mxu0 0
    %1171 = vmatpush1.bf16.msra.mxu0 %v1151
    %1172 = vmatprep.subr.bf16.mxu0 0
    %1173 = vmatpush1.bf16.msra.mxu0 %v1152
    %1174 = vmatprep.subr.bf16.mxu0 0
    %1175 = vmatpush1.bf16.msra.mxu0 %v1153
    %1176 = vmatprep.subr.bf16.mxu0 0
    %1177 = vmatpush1.bf16.msra.mxu0 %v1154
    %1178 = vmatprep.subr.bf16.mxu0 0
    %1179 = vmatpush1.bf16.msra.mxu0 %v1155
    %1180 = vmatprep.subr.bf16.mxu0 0
    %1181 = vmatpush1.bf16.msra.mxu0 0
    %1182 = vmatprep.subr.bf16.mxu0 0
    %1183 = vmatpush1.bf16.msra.mxu0 0
    %1184 = vmatprep.subr.bf16.mxu0 0
    %1185 = vmatpush1.bf16.msra.mxu0 0
    %1186 = vmatprep.subr.bf16.mxu0 0
    %1187 = vmatpush1.bf16.msra.mxu0 0
    %1188 = vmatprep.subr.bf16.mxu0 0
    %1189 = vmatpush1.bf16.msra.mxu0 0
    %1190 = vmatprep.subr.bf16.mxu0 0
    %1191 = vmatpush1.bf16.msra.mxu0 0
    %1192 = vmatprep.subr.bf16.mxu0 0
    %1193 = vmatpush1.bf16.msra.mxu0 0
    %1194 = vmatprep.subr.bf16.mxu0 0
    %1195 = vmatpush1.bf16.msra.mxu0 0
    %1196 = vmatprep.mubr.bf16.mxu0 0
    %1197 = vmatmul.mubr.bf16.gmra.mrb[0].mxu0 %v1092
    %v1198 = vpop.f32.mrb[0].mxu0
    %v1199 = vadd.f32 %v1114, %v1198
    %v1200 = vpop.f32.mrb[0].mxu0
    %v1201 = vpop.f32.mrb[0].mxu0
    %v1202 = vpop.f32.mrb[0].mxu0
    %1203 = vdwg.mxu0
    %1204 = vst [vmem:[#allocation2] sm:$0x3] %v1199
    // Predicated region
    $region30: #{gcn_layers_sum_forward.1} parent=1 // pred_check
      _
    $region31: #{gcn_layers_sum_forward.1} parent=1 // pred_check_branch
      %1206 = sbr.rel (0) target = $region33
    $region32: #{gcn_layers_sum_forward.1} parent=1 // pred_region
      %s1208 = ssub.s32 32, 32
      %1209 = vsyncadd [#allocation3], %s1208
      %s1211 = sshll.u32 [#allocation2], 4
      %s1212 = int_to_ptr.vmem [resolvable:$true] %s1211
      %1214 = dma.vmem_to_hbm [thread:$0]  %s1212, 32, %s7, [#allocation3]
    $region33: #{gcn_layers_sum_forward.1} parent=1 // pred_fallthru
      _
    // Predicated region
    $region34: #{gcn_layers_sum_forward.1} parent=1 // pred_check
      _
    $region35: #{gcn_layers_sum_forward.1} parent=1 // pred_check_branch
      %1216 = sbr.rel (0) target = $region37
    $region36: #{gcn_layers_sum_forward.1} parent=1 // pred_region
      %1217 = dma.done [#allocation3], 32
    $region37: #{gcn_layers_sum_forward.1} parent=1 // pred_fallthru
      _
    %1218 = vsyncpa [#allocation3], 1

</llo_original>
